<compile_context>
chip_gen: v7x
topology: tpu7x:2x2x1
jax: 0.10.0
libtpu: 0.0.40
codegen_flags: <defaults>
</compile_context>

<pallas_src>
import jax
import jax.numpy as jnp
import numpy as np
from jax.experimental import pallas as pl
from jax.experimental.pallas import tpu as pltpu


def _passthrough_r_kernel(xr_ref, or_ref):
    """Identity copy of the lane-dense inputR slab through VMEM."""
    or_ref[...] = xr_ref[...]


def batchnorm_geometry_forward(inputR, inputSPD):
    """Mirrors BatchNorm_Geometry.forward: returns (inputR, inputSPD) unchanged.

    Only inputR goes through the (required) Pallas kernel; inputSPD is passed
    straight through the wrapper.
    """
    N, C, H, W = inputR.shape

    # Lane-dense 2D presentation: (N*C, H*W) = (8, 256) for the example shapes.
    # Keep it this way (not e.g. (2, 1024)) so the sublane dim stays 8 and the
    # store stays a full-width unmasked vst on all generations.
    xr2 = inputR.reshape(N * C, H * W)
    bytes_r = xr2.size * xr2.dtype.itemsize

    outR2 = pl.pallas_call(
        _passthrough_r_kernel,
        out_shape=jax.ShapeDtypeStruct(xr2.shape, xr2.dtype),
        # Gridless: whole-array blocks, no grid axis, no index bookkeeping.
        in_specs=[pl.BlockSpec(xr2.shape, lambda: (0, 0))],
        out_specs=pl.BlockSpec(xr2.shape, lambda: (0, 0)),
        # Let the output reuse the input HBM buffer.
        input_output_aliases={0: 0},
        cost_estimate=pl.CostEstimate(
            flops=0,
            transcendentals=0,
            bytes_accessed=2 * bytes_r,  # read + write of the R slab
        ),
    )(xr2)

    outputR = outR2.reshape(N, C, H, W)
    return outputR, inputSPD


if __name__ == "__main__":
    # Shapes consistent with the module: N=2, num_features(C)=4, H=W=16,
    # SPD matrices of shape (N, C, C).
    N, C, H, W = 2, 4, 16, 16

    key = jax.random.PRNGKey(0)
    kx, ks = jax.random.split(key)

    inputR = jax.random.normal(kx, (N, C, H, W), jnp.float32)
    A = jax.random.normal(ks, (N, C, C), jnp.float32)
    inputSPD = jnp.matmul(A, jnp.swapaxes(A, 1, 2))  # SPD matrices

    # Host-side snapshots for the reference check (robust even if the aliased
    # input buffer is donated/reused by XLA).
    inputR_ref = np.asarray(inputR)
    inputSPD_ref = np.asarray(inputSPD)

    outR, outSPD = batchnorm_geometry_forward(inputR, inputSPD)
    outR, outSPD = jax.block_until_ready((outR, outSPD))

    # Reference: BatchNorm_Geometry.forward is the identity on (inputR, inputSPD).
    np.testing.assert_allclose(np.asarray(outR), inputR_ref, rtol=0, atol=0)
    np.testing.assert_allclose(np.asarray(outSPD), inputSPD_ref, rtol=0, atol=0)

    print("KERNEL_OK")
</pallas_src>

<mosaic_0001>
module attributes {stable_mosaic.version = 11 : i64} {
  func.func @_passthrough_r_kernel(%arg0: memref<8x256xf32, #tpu.memory_space<vmem>>, %arg1: memref<8x256xf32, #tpu.memory_space<vmem>>) attributes {dimension_semantics = [], scalar_prefetch = 0 : i64, scratch_operands = 0 : i64, tpu.core_type = #tpu.core_type<tc>} {
    %c0 = arith.constant 0 : index
    %c0_0 = arith.constant 0 : index
    %0 = vector.load %arg0[%c0, %c0_0] : memref<8x256xf32, #tpu.memory_space<vmem>>, vector<8x256xf32>
    %c0_1 = arith.constant 0 : index
    %c0_2 = arith.constant 0 : index
    %1 = vector.load %arg1[%c0_1, %c0_2] : memref<8x256xf32, #tpu.memory_space<vmem>>, vector<8x256xf32>
    tpu.vector_store %arg1[%c0_1, %c0_2], %0 {strides = array<i32>} : memref<8x256xf32, #tpu.memory_space<vmem>>, vector<8x256xf32>,
    return
  }
}

</mosaic_0001>

<llo_original>
// kernel: tpu_custom_call.1
$region0: #{tpu_custom_call.1}
  #allocation0 [shape = 'u32[]', space=smem, size = 0x4, offset = 0x4, fixed_abs, tag = 'smem constant byte address 0x4 - core index']
  #allocation1 [shape = 'u32[144,128]{1,0:T(1,128)}', space=vmem, size = 0x12000, scoped, tag = 'internal scratch']
  %s0 = inlined_call_operand.hbm [shape: f32[8,256], index: 0, kind: input, shape index: {}, may-alias: {0,1}]
  %s1 = inlined_call_operand.hbm [shape: f32[8,256], index: 1, kind: output, shape index: {}, may-alias: {0,1}]
  %s2 = sld [smem:[#allocation0]]
  $region18: #{tpu_custom_call.1} parent=0
    _
  %s4 = ssub.s32 1, %s2
  %s5 = scalar_select 0, %s4, %s2
  $region1: #{tpu_custom_call.1} parent=0
    #allocation2 [shape = 'u8[8192]{0}', space=vmem, size = 0x2000, scoped, tag = 'input window, operand 0, single buffered']
    #allocation3 [shape = 's32[1]{0}', space=sflag, size = 0x4, scoped, tag = 'scoped memory for tpu_custom_call.1']
    #allocation4 [shape = 's32[1]{0}', space=sflag, size = 0x4, scoped, tag = 'scoped memory for tpu_custom_call.1']
    #allocation5 [shape = 'u8[8192]{0}', space=vmem, size = 0x2000, scoped, tag = 'output window, operand 0, single buffered']
    %6 = vsyncpa [#allocation3], 0
    %7 = vsyncpa [#allocation4], 0
    // Predicated region
    $region2: #{tpu_custom_call.1} parent=1 // pred_check
      _
    $region3: #{tpu_custom_call.1} parent=1 // pred_check_branch
      %9 = sbr.rel (0) target = $region5
    $region4: #{tpu_custom_call.1} parent=1 // pred_region
      %s11 = ssub.s32 256, 256
      %12 = vsyncadd [#allocation3], %s11
      %s14 = sshll.u32 [#allocation2], 4
      %s15 = int_to_ptr.vmem [resolvable:$true] %s14
      %17 = dma.hbm_to_vmem [thread:$0]  %s0, 256, %s15, [#allocation3]
    $region5: #{tpu_custom_call.1} parent=1 // pred_fallthru
      _
    // Predicated region
    $region6: #{tpu_custom_call.1} parent=1 // pred_check
      _
    $region7: #{tpu_custom_call.1} parent=1 // pred_check_branch
      %19 = sbr.rel (0) target = $region9
    $region8: #{tpu_custom_call.1} parent=1 // pred_region
      %20 = dma.done [#allocation3], 256
    $region9: #{tpu_custom_call.1} parent=1 // pred_fallthru
      _
    %v21 = vld [vmem:[#allocation2] sm:$0xff]
    %v22 = vld [vmem:[#allocation2 + $0x8] sm:$0xff]
    %23 = vst [vmem:[#allocation5] sm:$0xff] %v21
    %24 = vst [vmem:[#allocation5 + $0x8] sm:$0xff] %v22
    // Predicated region
    $region10: #{tpu_custom_call.1} parent=1 // pred_check
      _
    $region11: #{tpu_custom_call.1} parent=1 // pred_check_branch
      %26 = sbr.rel (0) target = $region13
    $region12: #{tpu_custom_call.1} parent=1 // pred_region
      %s28 = ssub.s32 256, 256
      %29 = vsyncadd [#allocation4], %s28
      %s31 = sshll.u32 [#allocation5], 4
      %s32 = int_to_ptr.vmem [resolvable:$true] %s31
      %34 = dma.vmem_to_hbm [thread:$0]  %s32, 256, %s1, [#allocation4]
    $region13: #{tpu_custom_call.1} parent=1 // pred_fallthru
      _
    // Predicated region
    $region14: #{tpu_custom_call.1} parent=1 // pred_check
      _
    $region15: #{tpu_custom_call.1} parent=1 // pred_check_branch
      %36 = sbr.rel (0) target = $region17
    $region16: #{tpu_custom_call.1} parent=1 // pred_region
      %37 = dma.done [#allocation4], 256
    $region17: #{tpu_custom_call.1} parent=1 // pred_fallthru
      _
    %38 = vsyncpa [#allocation3], 1
    %39 = vsyncpa [#allocation4], 1

</llo_original>
